<compile_context>
chip_gen: v5e
topology: v5e:2x2
jax: 0.10.0
libtpu: 0.0.40
codegen_flags: <defaults>
</compile_context>

<pallas_src>
import functools

import numpy as np
import jax
import jax.numpy as jnp
from jax.experimental import pallas as pl
from jax.experimental.pallas import tpu as pltpu


def _round_up(n, m):
    return ((n + m - 1) // m) * m


def _next_pow2(n):
    p = 1
    while p < n:
        p *= 2
    return p


def _choose_tiles(n):
    """(tm, tk) for the L tiles.

    Powers of two so padding N to max(tm, tk) keeps both as divisors.
    Capped at 512: HBM-stream sweet spot while the double-buffered f32 tile is
    only 2 MiB -- comfortably inside every generation's VMEM (incl. v7x 64 MiB).
    """
    p = _next_pow2(max(n, 1))
    tm = min(512, max(8, p))     # sublane (row) tile: multiple of 8
    tk = min(512, max(128, p))   # lane / reduction tile: multiple of 128
    return tm, tk


def _inform_kernel(kcols_ref, kcnt_ref, l_ref, x_ref, out_ref, acc_ref,
                   *, tm, tk, max_k):
    """Grid = (row tiles of L, packed nonzero column tiles of that row)."""
    i = pl.program_id(0)   # row-tile index
    k = pl.program_id(1)   # position in the packed nonzero-tile list

    @pl.when(k == 0)
    def _zero():
        acc_ref[...] = jnp.zeros_like(acc_ref)

    # Only the first kcnt[i] entries of the packed list are real (nonzero) tiles.
    @pl.when(k < kcnt_ref[i])
    def _accumulate():
        kc = kcols_ref[i * max_k + k]                 # actual column-tile index
        row_start = pl.multiple_of(i * tm, tm)
        col_start = pl.multiple_of(kc * tk, tk)
        x_k = x_ref[pl.ds(col_start, tk), :]          # (tk, D) reduction block
        x_rows = x_ref[pl.ds(row_start, tm), :]       # (tm, D) matching rows
        # (tm, tk) @ (tk, D) on the MXU, f32 accumulation.
        lx = jnp.dot(l_ref[...].astype(jnp.float32),
                     x_k.astype(jnp.float32),
                     preferred_element_type=jnp.float32)
        acc_ref[...] += x_rows.astype(jnp.float32) * lx   # VPU, f32

    @pl.when(k == pl.num_programs(1) - 1)
    def _finalize():
        # Per-row-tile partial (reduced over rows only); the final scalar
        # reduction happens outside so the row axis can be "parallel".
        out_ref[...] = jnp.sum(acc_ref[...], axis=0,
                               keepdims=True).reshape(out_ref.shape)


@functools.partial(jax.jit, static_argnames=("tm", "tk", "max_k"))
def _inform_quadratic_form(kcols, kcnt, L_pad, x_pad, *, tm, tk, max_k):
    """Returns trace(x^T @ L @ x) for zero-padded L (n_pad, n_pad), x (n_pad, D)."""
    n_pad = L_pad.shape[0]
    d = x_pad.shape[1]
    nrow_t = n_pad // tm

    # Explicit VMEM budget (keeps us inside v7x's 64 MiB core as well).
    need = (2 * tm * tk * L_pad.dtype.itemsize       # double-buffered L tiles
            + 2 * n_pad * d * x_pad.dtype.itemsize   # resident x (x2 to be safe)
            + tm * d * 4                             # f32 accumulator scratch
            + 2 * 128 * 4)                           # tiny output block
    vmem_limit = int(min(max(need + (4 << 20), 16 << 20), 48 << 20))

    kernel = functools.partial(_inform_kernel, tm=tm, tk=tk, max_k=max_k)

    partials = pl.pallas_call(
        kernel,
        out_shape=jax.ShapeDtypeStruct((nrow_t, 1, d), jnp.float32),
        grid_spec=pltpu.PrefetchScalarGridSpec(
            num_scalar_prefetch=2,                   # kcols, kcnt -> SMEM
            grid=(nrow_t, max_k),
            in_specs=[
                # Packed nonzero (tm, tk) tile of L: the column block index
                # comes from the prefetched per-row-tile tile list.
                pl.BlockSpec(
                    (tm, tk),
                    lambda i, k, kcols_ref, kcnt_ref:
                        (i, kcols_ref[i * max_k + k])),
                # x stays resident in VMEM for the whole grid.
                pl.BlockSpec((n_pad, d),
                             lambda i, k, kcols_ref, kcnt_ref: (0, 0)),
            ],
            out_specs=pl.BlockSpec(
                (1, 1, d), lambda i, k, kcols_ref, kcnt_ref: (i, 0, 0)),
            scratch_shapes=[pltpu.VMEM((tm, d), jnp.float32)],
        ),
        compiler_params=pltpu.CompilerParams(
            dimension_semantics=("parallel", "arbitrary"),
            vmem_limit_bytes=vmem_limit,
        ),
    )(kcols, kcnt, L_pad, x_pad)

    return jnp.sum(partials)


class INFORMForTrainer:
    """JAX/Pallas re-implementation of the PyTorch INFORMForTrainer module."""

    def __init__(self, similarity_laplacian, train_idx, val_idx, test_idx,
                 l_dtype=jnp.float32):
        # l_dtype=jnp.bfloat16 halves the dominant L HBM stream (precision
        # tradeoff: matmul/accumulation stay f32, but re-validate tolerances).
        # TODO(synk): scipy-CSR / torch.sparse inputs are stood in by a dense
        # Laplacian; sparsity is instead exploited via per-tile block-skipping.
        L_full = jnp.asarray(similarity_laplacian)
        self._plans = {}
        for name, idx in (("train", train_idx), ("val", val_idx), ("test", test_idx)):
            L = L_full[jnp.ix_(idx, idx)]
            nnz = int(jnp.sum(L != 0))       # == sparse tensor nnz
            self._plans[name] = self._build_plan(L.astype(l_dtype), nnz)

    @staticmethod
    def _build_plan(L, nnz):
        n = L.shape[0]
        tm, tk = _choose_tiles(n)
        n_pad = _round_up(n, max(tm, tk))
        L_pad = jnp.zeros((n_pad, n_pad), L.dtype).at[:n, :n].set(L)

        # Per-(tm, tk)-tile nonzero mask -> packed per-row-tile list of the
        # nonzero column tiles (block-skipping of the sparse Laplacian).
        nrow_t, nk_t = n_pad // tm, n_pad // tk
        mask = np.asarray(
            jnp.any(L_pad.reshape(nrow_t, tm, nk_t, tk) != 0, axis=(1, 3)))
        kcnt = mask.sum(axis=1).astype(np.int32)             # (nrow_t,)
        max_k = max(int(kcnt.max()), 1)
        kcols = np.zeros((nrow_t, max_k), dtype=np.int32)
        for r in range(nrow_t):
            nz = np.nonzero(mask[r])[0].astype(np.int32)
            if nz.size == 0:
                nz = np.zeros((1,), np.int32)
            kcols[r, :nz.size] = nz
            # Pad by repeating the last real tile: unchanged block index on
            # padded steps => no extra DMA; compute is gated off by kcnt.
            kcols[r, nz.size:] = nz[-1]

        return dict(L=L_pad, n=n, n_pad=n_pad, tm=tm, tk=tk, max_k=max_k,
                    kcols=jnp.asarray(kcols.reshape(-1)),
                    kcnt=jnp.asarray(kcnt), nnz=nnz)

    def forward(self, x, stage):
        if stage == "train":
            plan = self._plans["train"]
        elif stage in ("val", "validation"):
            plan = self._plans["val"]
        elif stage == "test":
            plan = self._plans["test"]
        else:
            raise ValueError(
                "stage must be one of (`train`, `val`, `validation`, `test`)!")

        n, d = x.shape
        assert n == plan["n"], (n, plan["n"])
        x_pad = jnp.zeros((plan["n_pad"], d), jnp.float32).at[:n].set(
            x.astype(jnp.float32))

        quad = _inform_quadratic_form(
            plan["kcols"], plan["kcnt"], plan["L"], x_pad,
            tm=plan["tm"], tk=plan["tk"], max_k=plan["max_k"])

        if plan["nnz"] == 0:                        # guard against divide-by-zero
            return jnp.float32(0.0)
        return quad / jnp.float32(plan["nnz"])


def _make_synthetic_laplacian(key, n_nodes):
    """Symmetric, sparse-ish similarity -> Laplacian L = deg_diag - S."""
    u = jax.random.uniform(key, (n_nodes, n_nodes), dtype=jnp.float32)
    s = jnp.where(u > 0.8, u, 0.0)                         # sparsify
    s = 0.5 * (s + s.T)                                    # symmetrize
    s = s * (1.0 - jnp.eye(n_nodes, dtype=jnp.float32))    # zero diagonal
    deg = jnp.sum(s, axis=1)
    return jnp.diag(deg) - s


if __name__ == "__main__":
    key = jax.random.PRNGKey(0)
    k_lap, k_x = jax.random.split(key)

    n_total, d = 256, 32
    L_full = _make_synthetic_laplacian(k_lap, n_total)

    train_idx = jnp.arange(0, 128)
    val_idx = jnp.arange(128, 192)
    test_idx = jnp.arange(192, 256)

    x_full = jax.random.normal(k_x, (n_total, d), dtype=jnp.float32)

    module = INFORMForTrainer(L_full, train_idx, val_idx, test_idx)

    for stage, idx in (("train", train_idx), ("val", val_idx), ("test", test_idx)):
        x_stage = x_full[idx]
        bias = module.forward(x_stage, stage)
        jax.block_until_ready(bias)

        # Pure-JAX reference check.
        L = L_full[jnp.ix_(idx, idx)]
        nnz = int(jnp.sum(L != 0))
        ref = jnp.trace(x_stage.T @ (L @ x_stage)) / nnz
        assert jnp.allclose(bias, ref, rtol=1e-4, atol=1e-4), \
            (stage, float(bias), float(ref))

    print("KERNEL_OK")
</pallas_src>

<mosaic_0001>
module attributes {stable_mosaic.version = 11 : i64} {
  func.func @_inform_kernel(%arg0: i32, %arg1: i32, %arg2: memref<1xi32, #tpu.memory_space<smem>>, %arg3: memref<1xi32, #tpu.memory_space<smem>>, %arg4: memref<128x128xf32, #tpu.memory_space<vmem>>, %arg5: memref<128x32xf32, #tpu.memory_space<vmem>>, %arg6: memref<1x1x32xf32, #tpu.memory_space<vmem>>, %arg7: memref<128x32xf32, #tpu.memory_space<vmem>>) attributes {dimension_semantics = [#tpu.dimension_semantics<parallel>, #tpu.dimension_semantics<arbitrary>], iteration_bounds = array<i64: 1, 1>, scalar_prefetch = 2 : i64, scratch_operands = 1 : i64, tpu.core_type = #tpu.core_type<tc>, window_params = [{transform_indices = @transform_0, window_bounds = array<i64: 128, 128>}, {pipeline_mode = #tpu.pipeline_mode<synchronous>, transform_indices = @transform_1, window_bounds = array<i64: 128, 32>}, {transform_indices = @transform_2, window_bounds = array<i64: 1, 1, 32>}]} {
    %c0_i32 = arith.constant 0 : i32
    %0 = arith.cmpi eq, %arg1, %c0_i32 : i32
    %1 = arith.extui %0 : i1 to i32
    %c0_i32_0 = arith.constant 0 : i32
    %2 = arith.cmpi ne, %1, %c0_i32_0 : i32
    scf.if %2 {
      %cst = arith.constant 0.000000e+00 : f32
      %11 = vector.broadcast %cst : f32 to vector<128x32xf32>
      %c0 = arith.constant 0 : index
      %c0_4 = arith.constant 0 : index
      %12 = vector.load %arg7[%c0, %c0_4] : memref<128x32xf32, #tpu.memory_space<vmem>>, vector<128x32xf32>
      tpu.vector_store %arg7[%c0, %c0_4], %11 {strides = array<i32>} : memref<128x32xf32, #tpu.memory_space<vmem>>, vector<128x32xf32>,
    } else {
    }
    %3 = arith.index_cast %arg0 : i32 to index
    %4 = memref.load %arg3[%3] : memref<1xi32, #tpu.memory_space<smem>>
    %5 = arith.cmpi slt, %arg1, %4 : i32
    %6 = arith.extui %5 : i1 to i32
    %c0_i32_1 = arith.constant 0 : i32
    %7 = arith.cmpi ne, %6, %c0_i32_1 : i32
    scf.if %7 {
      %c1_i32 = arith.constant 1 : i32
      %11 = arith.muli %arg0, %c1_i32 : i32
      %12 = arith.addi %11, %arg1 : i32
      %13 = arith.index_cast %12 : i32 to index
      %14 = memref.load %arg2[%13] : memref<1xi32, #tpu.memory_space<smem>>
      %c128_i32 = arith.constant 128 : i32
      %15 = arith.muli %arg0, %c128_i32 : i32
      %16 = tpu.assume_multiple %15, 128 : i32
      %c128_i32_4 = arith.constant 128 : i32
      %17 = arith.muli %14, %c128_i32_4 : i32
      %18 = tpu.assume_multiple %17, 128 : i32
      %19 = arith.index_cast %18 : i32 to index
      %c0 = arith.constant 0 : index
      %20 = vector.load %arg5[%19, %c0] : memref<128x32xf32, #tpu.memory_space<vmem>>, vector<128x32xf32>
      %21 = arith.index_cast %16 : i32 to index
      %c0_5 = arith.constant 0 : index
      %22 = vector.load %arg5[%21, %c0_5] : memref<128x32xf32, #tpu.memory_space<vmem>>, vector<128x32xf32>
      %c0_6 = arith.constant 0 : index
      %c0_7 = arith.constant 0 : index
      %23 = vector.load %arg4[%c0_6, %c0_7] : memref<128x128xf32, #tpu.memory_space<vmem>>, vector<128x128xf32>
      %cst = arith.constant dense<0.000000e+00> : vector<128x32xf32>
      %24 = tpu.matmul %23, %20, %cst {dimension_numbers = #tpu.dot_dimension_numbers<[1], [0], [0], [1], [0, 0, 1, 1], [], []>} : vector<128x128xf32>, vector<128x32xf32>, vector<128x32xf32> -> vector<128x32xf32>
      %c0_8 = arith.constant 0 : index
      %c0_9 = arith.constant 0 : index
      %25 = vector.load %arg7[%c0_8, %c0_9] : memref<128x32xf32, #tpu.memory_space<vmem>>, vector<128x32xf32>
      %26 = arith.mulf %22, %24 : vector<128x32xf32>
      %27 = arith.addf %25, %26 : vector<128x32xf32>
      %c0_10 = arith.constant 0 : index
      %c0_11 = arith.constant 0 : index
      %28 = vector.load %arg7[%c0_10, %c0_11] : memref<128x32xf32, #tpu.memory_space<vmem>>, vector<128x32xf32>
      tpu.vector_store %arg7[%c0_10, %c0_11], %27 {strides = array<i32>} : memref<128x32xf32, #tpu.memory_space<vmem>>, vector<128x32xf32>,
    } else {
    }
    %c0_i32_2 = arith.constant 0 : i32
    %8 = arith.cmpi eq, %arg1, %c0_i32_2 : i32
    %9 = arith.extui %8 : i1 to i32
    %c0_i32_3 = arith.constant 0 : i32
    %10 = arith.cmpi ne, %9, %c0_i32_3 : i32
    scf.if %10 {
      %c0 = arith.constant 0 : index
      %c0_4 = arith.constant 0 : index
      %11 = vector.load %arg7[%c0, %c0_4] : memref<128x32xf32, #tpu.memory_space<vmem>>, vector<128x32xf32>
      %cst = arith.constant dense<0.000000e+00> : vector<32xf32>
      %12 = vector.multi_reduction <add>, %11, %cst [0] : vector<128x32xf32> to vector<32xf32>
      %13 = vector.shape_cast %12 : vector<32xf32> to vector<1x32xf32>
      %14 = vector.shape_cast %13 : vector<1x32xf32> to vector<1x1x32xf32>
      %c0_5 = arith.constant 0 : index
      %c0_6 = arith.constant 0 : index
      %c0_7 = arith.constant 0 : index
      %15 = vector.load %arg6[%c0_5, %c0_6, %c0_7] : memref<1x1x32xf32, #tpu.memory_space<vmem>>, vector<1x1x32xf32>
      tpu.vector_store %arg6[%c0_5, %c0_6, %c0_7], %14 {strides = array<i32>} : memref<1x1x32xf32, #tpu.memory_space<vmem>>, vector<1x1x32xf32>,
    } else {
    }
    return
  }
  func.func @transform_0(%arg0: i32, %arg1: i32, %arg2: memref<1xi32, #tpu.memory_space<smem>>, %arg3: memref<1xi32, #tpu.memory_space<smem>>) -> (i32, i32) {
    %c1_i32 = arith.constant 1 : i32
    %0 = arith.muli %arg0, %c1_i32 : i32
    %1 = arith.addi %0, %arg1 : i32
    %2 = arith.index_cast %1 : i32 to index
    %3 = memref.load %arg2[%2] : memref<1xi32, #tpu.memory_space<smem>>
    %c0_i32 = arith.constant 0 : i32
    return %arg0, %3 : i32, i32
  }
  func.func @transform_1(%arg0: i32, %arg1: i32, %arg2: memref<1xi32, #tpu.memory_space<smem>>, %arg3: memref<1xi32, #tpu.memory_space<smem>>) -> (i32, i32) {
    %c0_i32 = arith.constant 0 : i32
    %c0_i32_0 = arith.constant 0 : i32
    %c0_i32_1 = arith.constant 0 : i32
    return %c0_i32, %c0_i32_0 : i32, i32
  }
  func.func @transform_2(%arg0: i32, %arg1: i32, %arg2: memref<1xi32, #tpu.memory_space<smem>>, %arg3: memref<1xi32, #tpu.memory_space<smem>>) -> (i32, i32, i32) {
    %c0_i32 = arith.constant 0 : i32
    %c0_i32_0 = arith.constant 0 : i32
    %c0_i32_1 = arith.constant 0 : i32
    return %arg0, %c0_i32, %c0_i32_0 : i32, i32, i32
  }
}

</mosaic_0001>

<llo_original>
// kernel: _inform_quadratic_form.1
$region0: #{_inform_quadratic_form.1}
  #allocation0 [shape = 'u32[]', space=smem, size = 0x4, offset = 0x4, fixed_abs, tag = 'smem constant byte address 0x4 - core index']
  #allocation1 [shape = 'u32[72,128]{1,0:T(1,128)}', space=vmem, size = 0x9000, scoped, tag = 'internal scratch']
  #allocation2 [shape = 'f32[128,32]{1,0:T(8,128)}', space=vmem, size = 0x10000, scoped, tag = 'scratch operand']
  #allocation3 [shape = 's32[1]{0}', space=sflag, size = 0x4, scoped, tag = 'scoped memory for _inform_quadratic_form.1']
  #allocation4 [shape = 's32[1]{0:T(128)S(6)}', space=smem, size = 0x200, scoped, tag = 'prefetched SMEM operand 0']
  #allocation5 [shape = 's32[1]{0:T(128)S(6)}', space=smem, size = 0x200, scoped, tag = 'prefetched SMEM operand 1']
  %s0 = inlined_call_operand.<no memory space> [shape: s32[1], index: 0, kind: input, shape index: {}]
  %s1 = inlined_call_operand.<no memory space> [shape: s32[1], index: 1, kind: input, shape index: {}]
  %s2 = inlined_call_operand.vmem [shape: f32[128,128], index: 2, kind: input, shape index: {}]
  %s3 = inlined_call_operand.vmem [shape: f32[128,32], index: 3, kind: input, shape index: {}]
  %s4 = inlined_call_operand.vmem [shape: f32[1,1,32], index: 4, kind: output, shape index: {}]
  %s5 = sld [smem:[#allocation0]]
  $region30: #{_inform_quadratic_form.1} parent=0
    _
  %s7 = ssub.s32 1, %s5
  %s8 = scalar_select 0, %s7, %s5
  %9 = sst [smem:[#allocation4]] %s0
  %10 = sst [smem:[#allocation5]] %s1
  // Predicated region
  $region2: #{_inform_quadratic_form.1} parent=0 // pred_check
    _
  $region3: #{_inform_quadratic_form.1} parent=0 // pred_check_branch
    %12 = sbr.rel (0) target = $region5
  $region4: #{_inform_quadratic_form.1} parent=0 // pred_region
    %s13 = sadd.s32 0, 0
    %s14 = sld [smem:[#allocation4 + %s13]]
    %p15 = scmp.lt.s32.totalorder %s14, 0
    %s16 = scalar_select %p15, %s14, 0
    %s17 = smul.addr %s16, 8
    %s18 = scalar_lea.vmem %s2, %s17
    %s19 = sadd.s32 0, 0
    %s20 = sld [smem:[#allocation4 + %s19]]
  $region5: #{_inform_quadratic_form.1} parent=0 // pred_fallthru
    _
  // Predicated region
  $region6: #{_inform_quadratic_form.1} parent=0 // pred_check
    _
  $region7: #{_inform_quadratic_form.1} parent=0 // pred_check_branch
    %22 = sbr.rel (0) target = $region9
  $region8: #{_inform_quadratic_form.1} parent=0 // pred_region
    _
  $region9: #{_inform_quadratic_form.1} parent=0 // pred_fallthru
    _
  %s23 = sadd.s32 0, 0
  %s24 = sld [smem:[#allocation4 + %s23]]
  %p25 = scmp.lt.s32.totalorder %s24, 0
  %s26 = scalar_select %p25, %s24, 0
  %s27 = smul.addr %s26, 8
  %s28 = scalar_lea.vmem %s2, %s27
  %s29 = sadd.s32 0, 0
  %s30 = sld [smem:[#allocation4 + %s29]]
  %p31 = scmp.lt.s32.totalorder %s30, 0
  %s32 = scalar_select %p31, %s30, 0
  %s33 = smul.addr %s32, 8
  %s34 = scalar_lea.vmem %s2, %s33
  %s35 = sadd.s32 0, 0
  %s36 = sld [smem:[#allocation4 + %s35]]
  %p37 = scmp.eq.s32.totalorder 0, 0
  // Predicated region
  $region10: #{_inform_quadratic_form.1} parent=0 // pred_check
    %p38 = pneg %p37
  $region11: #{_inform_quadratic_form.1} parent=0 // pred_check_branch
    %40 = sbr.rel (%p38) target = $region13
  $region12: #{_inform_quadratic_form.1} parent=0 // pred_region
    %vm41 = vcmask 261120
    %42 = vst.msk [vmem:[#allocation2] sm:$0xff] %vm41, 0.0
    %43 = vst.msk [vmem:[#allocation2 + $0x8] sm:$0xff] %vm41, 0.0
    %44 = vst.msk [vmem:[#allocation2 + $0x10] sm:$0xff] %vm41, 0.0
    %45 = vst.msk [vmem:[#allocation2 + $0x18] sm:$0xff] %vm41, 0.0
    %46 = vst.msk [vmem:[#allocation2 + $0x20] sm:$0xff] %vm41, 0.0
    %47 = vst.msk [vmem:[#allocation2 + $0x28] sm:$0xff] %vm41, 0.0
    %48 = vst.msk [vmem:[#allocation2 + $0x30] sm:$0xff] %vm41, 0.0
    %49 = vst.msk [vmem:[#allocation2 + $0x38] sm:$0xff] %vm41, 0.0
    %50 = vst.msk [vmem:[#allocation2 + $0x40] sm:$0xff] %vm41, 0.0
    %51 = vst.msk [vmem:[#allocation2 + $0x48] sm:$0xff] %vm41, 0.0
    %52 = vst.msk [vmem:[#allocation2 + $0x50] sm:$0xff] %vm41, 0.0
    %53 = vst.msk [vmem:[#allocation2 + $0x58] sm:$0xff] %vm41, 0.0
    %54 = vst.msk [vmem:[#allocation2 + $0x60] sm:$0xff] %vm41, 0.0
    %55 = vst.msk [vmem:[#allocation2 + $0x68] sm:$0xff] %vm41, 0.0
    %56 = vst.msk [vmem:[#allocation2 + $0x70] sm:$0xff] %vm41, 0.0
    %57 = vst.msk [vmem:[#allocation2 + $0x78] sm:$0xff] %vm41, 0.0
  $region13: #{_inform_quadratic_form.1} parent=0 // pred_fallthru
    _
  %s58 = sld [smem:[#allocation5]]
  %p59 = scmp.lt.s32.totalorder 0, %s58
  // Predicated region
  $region14: #{_inform_quadratic_form.1} parent=0 // pred_check
    %p60 = pneg %p59
  $region15: #{_inform_quadratic_form.1} parent=0 // pred_check_branch
    %62 = sbr.rel (%p60) target = $region17
  $region16: #{_inform_quadratic_form.1} parent=0 // pred_region
    %s63 = sadd.s32 0, 0
    %s64 = sld [smem:[#allocation4 + %s63]]
    %s65 = smul.u32 0, 128
    %s66 = smul.u32 %s64, 128
    %s67 = scalar_lea.vmem %s3, %s66
    %v68 = vld [vmem:[%s67] sm:$0xff]
    %v69 = vld [vmem:[%s67 + $0x8] sm:$0xff]
    %v70 = vld [vmem:[%s67 + $0x10] sm:$0xff]
    %v71 = vld [vmem:[%s67 + $0x18] sm:$0xff]
    %v72 = vld [vmem:[%s67 + $0x20] sm:$0xff]
    %v73 = vld [vmem:[%s67 + $0x28] sm:$0xff]
    %v74 = vld [vmem:[%s67 + $0x30] sm:$0xff]
    %v75 = vld [vmem:[%s67 + $0x38] sm:$0xff]
    %v76 = vld [vmem:[%s67 + $0x40] sm:$0xff]
    %v77 = vld [vmem:[%s67 + $0x48] sm:$0xff]
    %v78 = vld [vmem:[%s67 + $0x50] sm:$0xff]
    %v79 = vld [vmem:[%s67 + $0x58] sm:$0xff]
    %v80 = vld [vmem:[%s67 + $0x60] sm:$0xff]
    %v81 = vld [vmem:[%s67 + $0x68] sm:$0xff]
    %v82 = vld [vmem:[%s67 + $0x70] sm:$0xff]
    %v83 = vld [vmem:[%s67 + $0x78] sm:$0xff]
    %s84 = scalar_lea.vmem %s3, %s65
    %v85 = vld [vmem:[%s84] sm:$0xff]
    %v86 = vld [vmem:[%s84 + $0x8] sm:$0xff]
    %v87 = vld [vmem:[%s84 + $0x10] sm:$0xff]
    %v88 = vld [vmem:[%s84 + $0x18] sm:$0xff]
    %v89 = vld [vmem:[%s84 + $0x20] sm:$0xff]
    %v90 = vld [vmem:[%s84 + $0x28] sm:$0xff]
    %v91 = vld [vmem:[%s84 + $0x30] sm:$0xff]
    %v92 = vld [vmem:[%s84 + $0x38] sm:$0xff]
    %v93 = vld [vmem:[%s84 + $0x40] sm:$0xff]
    %v94 = vld [vmem:[%s84 + $0x48] sm:$0xff]
    %v95 = vld [vmem:[%s84 + $0x50] sm:$0xff]
    %v96 = vld [vmem:[%s84 + $0x58] sm:$0xff]
    %v97 = vld [vmem:[%s84 + $0x60] sm:$0xff]
    %v98 = vld [vmem:[%s84 + $0x68] sm:$0xff]
    %v99 = vld [vmem:[%s84 + $0x70] sm:$0xff]
    %v100 = vld [vmem:[%s84 + $0x78] sm:$0xff]
    %v101 = vld [vmem:[%s34] sm:$0xff]
    %v102 = vld [vmem:[%s34 + $0x8] sm:$0xff]
    %v103 = vld [vmem:[%s34 + $0x10] sm:$0xff]
    %v104 = vld [vmem:[%s34 + $0x18] sm:$0xff]
    %v105 = vld [vmem:[%s34 + $0x20] sm:$0xff]
    %v106 = vld [vmem:[%s34 + $0x28] sm:$0xff]
    %v107 = vld [vmem:[%s34 + $0x30] sm:$0xff]
    %v108 = vld [vmem:[%s34 + $0x38] sm:$0xff]
    %v109 = vld [vmem:[%s34 + $0x40] sm:$0xff]
    %v110 = vld [vmem:[%s34 + $0x48] sm:$0xff]
    %v111 = vld [vmem:[%s34 + $0x50] sm:$0xff]
    %v112 = vld [vmem:[%s34 + $0x58] sm:$0xff]
    %v113 = vld [vmem:[%s34 + $0x60] sm:$0xff]
    %v114 = vld [vmem:[%s34 + $0x68] sm:$0xff]
    %v115 = vld [vmem:[%s34 + $0x70] sm:$0xff]
    %v116 = vld [vmem:[%s34 + $0x78] sm:$0xff]
    %117 = vmatpush.msra.mxu0 %v83
    %118 = vmatpush.msra.mxu0 %v82
    %119 = vmatpush.msra.mxu0 %v81
    %120 = vmatpush.msra.mxu0 %v80
    %121 = vmatpush.msra.mxu0 %v79
    %122 = vmatpush.msra.mxu0 %v78
    %123 = vmatpush.msra.mxu0 %v77
    %124 = vmatpush.msra.mxu0 %v76
    %125 = vmatpush.msra.mxu0 %v75
    %126 = vmatpush.msra.mxu0 %v74
    %127 = vmatpush.msra.mxu0 %v73
    %128 = vmatpush.msra.mxu0 %v72
    %129 = vmatpush.msra.mxu0 %v71
    %130 = vmatpush.msra.mxu0 %v70
    %131 = vmatpush.msra.mxu0 %v69
    %132 = vmatpush.msra.mxu0 %v68
    %133 = vmatmul.f32.gmra.mxu0 %v101
    %v134 = vpop.f32.mrf.mxu0
    %v135 = vadd.f32 0.0, %v134
    %136 = vmatmul.f32.gmra.mxu0 %v102
    %v137 = vpop.f32.mrf.mxu0
    %v138 = vadd.f32 0.0, %v137
    %139 = vmatmul.f32.gmra.mxu0 %v103
    %v140 = vpop.f32.mrf.mxu0
    %v141 = vadd.f32 0.0, %v140
    %142 = vmatmul.f32.gmra.mxu0 %v104
    %v143 = vpop.f32.mrf.mxu0
    %v144 = vadd.f32 0.0, %v143
    %145 = vmatmul.f32.gmra.mxu0 %v105
    %v146 = vpop.f32.mrf.mxu0
    %v147 = vadd.f32 0.0, %v146
    %148 = vmatmul.f32.gmra.mxu0 %v106
    %v149 = vpop.f32.mrf.mxu0
    %v150 = vadd.f32 0.0, %v149
    %151 = vmatmul.f32.gmra.mxu0 %v107
    %v152 = vpop.f32.mrf.mxu0
    %v153 = vadd.f32 0.0, %v152
    %154 = vmatmul.f32.gmra.mxu0 %v108
    %v155 = vpop.f32.mrf.mxu0
    %v156 = vadd.f32 0.0, %v155
    %157 = vmatmul.f32.gmra.mxu0 %v109
    %v158 = vpop.f32.mrf.mxu0
    %v159 = vadd.f32 0.0, %v158
    %160 = vmatmul.f32.gmra.mxu0 %v110
    %v161 = vpop.f32.mrf.mxu0
    %v162 = vadd.f32 0.0, %v161
    %163 = vmatmul.f32.gmra.mxu0 %v111
    %v164 = vpop.f32.mrf.mxu0
    %v165 = vadd.f32 0.0, %v164
    %166 = vmatmul.f32.gmra.mxu0 %v112
    %v167 = vpop.f32.mrf.mxu0
    %v168 = vadd.f32 0.0, %v167
    %169 = vmatmul.f32.gmra.mxu0 %v113
    %v170 = vpop.f32.mrf.mxu0
    %v171 = vadd.f32 0.0, %v170
    %172 = vmatmul.f32.gmra.mxu0 %v114
    %v173 = vpop.f32.mrf.mxu0
    %v174 = vadd.f32 0.0, %v173
    %175 = vmatmul.f32.gmra.mxu0 %v115
    %v176 = vpop.f32.mrf.mxu0
    %v177 = vadd.f32 0.0, %v176
    %178 = vmatmul.f32.gmra.mxu0 %v116
    %v179 = vpop.f32.mrf.mxu0
    %v180 = vadd.f32 0.0, %v179
    %181 = vdwg.mxu0
    %v182 = vld [vmem:[#allocation2] sm:$0xff]
    %v183 = vld [vmem:[#allocation2 + $0x8] sm:$0xff]
    %v184 = vld [vmem:[#allocation2 + $0x10] sm:$0xff]
    %v185 = vld [vmem:[#allocation2 + $0x18] sm:$0xff]
    %v186 = vld [vmem:[#allocation2 + $0x20] sm:$0xff]
    %v187 = vld [vmem:[#allocation2 + $0x28] sm:$0xff]
    %v188 = vld [vmem:[#allocation2 + $0x30] sm:$0xff]
    %v189 = vld [vmem:[#allocation2 + $0x38] sm:$0xff]
    %v190 = vld [vmem:[#allocation2 + $0x40] sm:$0xff]
    %v191 = vld [vmem:[#allocation2 + $0x48] sm:$0xff]
    %v192 = vld [vmem:[#allocation2 + $0x50] sm:$0xff]
    %v193 = vld [vmem:[#allocation2 + $0x58] sm:$0xff]
    %v194 = vld [vmem:[#allocation2 + $0x60] sm:$0xff]
    %v195 = vld [vmem:[#allocation2 + $0x68] sm:$0xff]
    %v196 = vld [vmem:[#allocation2 + $0x70] sm:$0xff]
    %v197 = vld [vmem:[#allocation2 + $0x78] sm:$0xff]
    %v198 = vmul.f32 %v85, %v135
    %v199 = vmul.f32 %v86, %v138
    %v200 = vmul.f32 %v87, %v141
    %v201 = vmul.f32 %v88, %v144
    %v202 = vmul.f32 %v89, %v147
    %v203 = vmul.f32 %v90, %v150
    %v204 = vmul.f32 %v91, %v153
    %v205 = vmul.f32 %v92, %v156
    %v206 = vmul.f32 %v93, %v159
    %v207 = vmul.f32 %v94, %v162
    %v208 = vmul.f32 %v95, %v165
    %v209 = vmul.f32 %v96, %v168
    %v210 = vmul.f32 %v97, %v171
    %v211 = vmul.f32 %v98, %v174
    %v212 = vmul.f32 %v99, %v177
    %v213 = vmul.f32 %v100, %v180
    %v214 = vadd.f32 %v182, %v198
    %v215 = vadd.f32 %v183, %v199
    %v216 = vadd.f32 %v184, %v200
    %v217 = vadd.f32 %v185, %v201
    %v218 = vadd.f32 %v186, %v202
    %v219 = vadd.f32 %v187, %v203
    %v220 = vadd.f32 %v188, %v204
    %v221 = vadd.f32 %v189, %v205
    %v222 = vadd.f32 %v190, %v206
    %v223 = vadd.f32 %v191, %v207
    %v224 = vadd.f32 %v192, %v208
    %v225 = vadd.f32 %v193, %v209
    %v226 = vadd.f32 %v194, %v210
    %v227 = vadd.f32 %v195, %v211
    %v228 = vadd.f32 %v196, %v212
    %v229 = vadd.f32 %v197, %v213
    %vm230 = vcmask 261120
    %231 = vst.msk [vmem:[#allocation2] sm:$0xff] %vm230, %v214
    %232 = vst.msk [vmem:[#allocation2 + $0x8] sm:$0xff] %vm230, %v215
    %233 = vst.msk [vmem:[#allocation2 + $0x10] sm:$0xff] %vm230, %v216
    %234 = vst.msk [vmem:[#allocation2 + $0x18] sm:$0xff] %vm230, %v217
    %235 = vst.msk [vmem:[#allocation2 + $0x20] sm:$0xff] %vm230, %v218
    %236 = vst.msk [vmem:[#allocation2 + $0x28] sm:$0xff] %vm230, %v219
    %237 = vst.msk [vmem:[#allocation2 + $0x30] sm:$0xff] %vm230, %v220
    %238 = vst.msk [vmem:[#allocation2 + $0x38] sm:$0xff] %vm230, %v221
    %239 = vst.msk [vmem:[#allocation2 + $0x40] sm:$0xff] %vm230, %v222
    %240 = vst.msk [vmem:[#allocation2 + $0x48] sm:$0xff] %vm230, %v223
    %241 = vst.msk [vmem:[#allocation2 + $0x50] sm:$0xff] %vm230, %v224
    %242 = vst.msk [vmem:[#allocation2 + $0x58] sm:$0xff] %vm230, %v225
    %243 = vst.msk [vmem:[#allocation2 + $0x60] sm:$0xff] %vm230, %v226
    %244 = vst.msk [vmem:[#allocation2 + $0x68] sm:$0xff] %vm230, %v227
    %245 = vst.msk [vmem:[#allocation2 + $0x70] sm:$0xff] %vm230, %v228
    %246 = vst.msk [vmem:[#allocation2 + $0x78] sm:$0xff] %vm230, %v229
  $region17: #{_inform_quadratic_form.1} parent=0 // pred_fallthru
    _
  // Predicated region
  $region18: #{_inform_quadratic_form.1} parent=0 // pred_check
    %p247 = pneg %p37
  $region19: #{_inform_quadratic_form.1} parent=0 // pred_check_branch
    %249 = sbr.rel (%p247) target = $region21
  $region20: #{_inform_quadratic_form.1} parent=0 // pred_region
    %v250 = vld [vmem:[#allocation2] sm:$0xff]
    %v251 = vld [vmem:[#allocation2 + $0x8] sm:$0xff]
    %v252 = vld [vmem:[#allocation2 + $0x10] sm:$0xff]
    %v253 = vld [vmem:[#allocation2 + $0x18] sm:$0xff]
    %v254 = vld [vmem:[#allocation2 + $0x20] sm:$0xff]
    %v255 = vld [vmem:[#allocation2 + $0x28] sm:$0xff]
    %v256 = vld [vmem:[#allocation2 + $0x30] sm:$0xff]
    %v257 = vld [vmem:[#allocation2 + $0x38] sm:$0xff]
    %v258 = vld [vmem:[#allocation2 + $0x40] sm:$0xff]
    %v259 = vld [vmem:[#allocation2 + $0x48] sm:$0xff]
    %v260 = vld [vmem:[#allocation2 + $0x50] sm:$0xff]
    %v261 = vld [vmem:[#allocation2 + $0x58] sm:$0xff]
    %v262 = vld [vmem:[#allocation2 + $0x60] sm:$0xff]
    %v263 = vld [vmem:[#allocation2 + $0x68] sm:$0xff]
    %v264 = vld [vmem:[#allocation2 + $0x70] sm:$0xff]
    %v265 = vld [vmem:[#allocation2 + $0x78] sm:$0xff]
    %vm266 = vcmask 261120
    %v267 = vsel %vm266, %v250, 0.0
    %v268 = vsel %vm266, %v251, 0.0
    %v269 = vadd.f32 %v267, %v268
    %v270 = vsel %vm266, %v252, 0.0
    %v271 = vadd.f32 %v269, %v270
    %v272 = vsel %vm266, %v253, 0.0
    %v273 = vadd.f32 %v271, %v272
    %v274 = vsel %vm266, %v254, 0.0
    %v275 = vadd.f32 %v273, %v274
    %v276 = vsel %vm266, %v255, 0.0
    %v277 = vadd.f32 %v275, %v276
    %v278 = vsel %vm266, %v256, 0.0
    %v279 = vadd.f32 %v277, %v278
    %v280 = vsel %vm266, %v257, 0.0
    %v281 = vadd.f32 %v279, %v280
    %v282 = vsel %vm266, %v258, 0.0
    %v283 = vadd.f32 %v281, %v282
    %v284 = vsel %vm266, %v259, 0.0
    %v285 = vadd.f32 %v283, %v284
    %v286 = vsel %vm266, %v260, 0.0
    %v287 = vadd.f32 %v285, %v286
    %v288 = vsel %vm266, %v261, 0.0
    %v289 = vadd.f32 %v287, %v288
    %v290 = vsel %vm266, %v262, 0.0
    %v291 = vadd.f32 %v289, %v290
    %v292 = vsel %vm266, %v263, 0.0
    %v293 = vadd.f32 %v291, %v292
    %v294 = vsel %vm266, %v264, 0.0
    %v295 = vadd.f32 %v293, %v294
    %v296 = vsel %vm266, %v265, 0.0
    %v297 = vadd.f32 %v295, %v296
    %v298 = vrot.slane %v297, 4
    %v299 = vadd.f32 %v297, %v298
    %v300 = vrot.slane %v299, 2
    %v301 = vadd.f32 %v299, %v300
    %v302 = vrot.slane %v301, 1
    %v303 = vadd.f32 %v301, %v302
    %vm304 = vcmask 253952
    %305 = vst.msk [vmem:[%s4] sm:$0x1] %vm304, %v303
  $region21: #{_inform_quadratic_form.1} parent=0 // pred_fallthru
    _
  // Predicated region
  $region22: #{_inform_quadratic_form.1} parent=0 // pred_check
    _
  $region23: #{_inform_quadratic_form.1} parent=0 // pred_check_branch
    %307 = sbr.rel (0) target = $region25
  $region24: #{_inform_quadratic_form.1} parent=0 // pred_region
    _
  $region25: #{_inform_quadratic_form.1} parent=0 // pred_fallthru
    _
  // Predicated region
  $region26: #{_inform_quadratic_form.1} parent=0 // pred_check
    _
  $region27: #{_inform_quadratic_form.1} parent=0 // pred_check_branch
    %309 = sbr.rel (0) target = $region29
  $region28: #{_inform_quadratic_form.1} parent=0 // pred_region
    _
  $region29: #{_inform_quadratic_form.1} parent=0 // pred_fallthru
    _

</llo_original>
